<compile_context>
chip_gen: v6e
topology: v6e:2x2x1
jax: 0.10.0
libtpu: 0.0.40
codegen_flags: <defaults>
</compile_context>

<pallas_src>
import math

import jax
import jax.numpy as jnp
from jax.experimental import pallas as pl
from jax.experimental.pallas import tpu as pltpu


def _sdpa_body(q_ref, k_ref, v_ref, mask_ref, ctx_ref, attn_ref):
    q = q_ref[...]                     # [B, S, D]
    k = k_ref[...]                     # [B, S, D]
    v = v_ref[...]                     # [B, S, D]
    d_model = q.shape[-1]

    # scores = Q @ K^T / sqrt(d_model)  -- batched dot_general, no transpose.
    scores = jnp.einsum("bqd,bkd->bqk", q, k,
                        preferred_element_type=jnp.float32)
    scores = scores * (1.0 / math.sqrt(d_model))          # [B, S, S] f32

    if mask_ref is not None:
        # masked_fill_(mask, -1e9): mask passed as float (1.0 == masked).
        scores = jnp.where(mask_ref[...] != 0.0, jnp.float32(-1e9), scores)

    # Numerically-stable softmax along the last dim (f32 throughout).
    m = jnp.max(scores, axis=-1, keepdims=True)
    e = jnp.exp(scores - m)
    denom = jnp.sum(e, axis=-1, keepdims=True)
    p = e * pl.reciprocal(denom, approx=True)              # EUP vrcp

    # context = attn @ V  -- batched dot_general contracting the key axis.
    ctx = jnp.einsum("bqk,bkd->bqd", p, v,
                     preferred_element_type=jnp.float32)

    ctx_ref[...] = ctx.astype(ctx_ref.dtype)               # lane-dense [B,S,D]
    attn_ref[...] = p.astype(attn_ref.dtype)


def _sdpa_kernel(q_ref, k_ref, v_ref, ctx_ref, attn_ref):
    _sdpa_body(q_ref, k_ref, v_ref, None, ctx_ref, attn_ref)


def _sdpa_masked_kernel(q_ref, k_ref, v_ref, mask_ref, ctx_ref, attn_ref):
    _sdpa_body(q_ref, k_ref, v_ref, mask_ref, ctx_ref, attn_ref)


def scaled_dot_product_attn(Q, K, V, mask=None):
    """Q, K, V: [..., S, D]; mask (optional, bool-ish): broadcastable to [..., S, S].

    Returns (context [..., S, D], attn [..., S, S]) matching the PyTorch module.
    """
    lead = Q.shape[:-2]
    S, D = Q.shape[-2], Q.shape[-1]
    B = 1
    for n in lead:
        B *= int(n)

    q3 = Q.reshape(B, S, D)
    k3 = K.reshape(B, S, D)
    v3 = V.reshape(B, S, D)

    out_shape = (jax.ShapeDtypeStruct((B, S, D), Q.dtype),
                 jax.ShapeDtypeStruct((B, S, S), jnp.float32))
    qkv_spec = pl.BlockSpec((B, S, D), lambda i: (0, 0, 0))
    ss_spec = pl.BlockSpec((B, S, S), lambda i: (0, 0, 0))
    cparams = pltpu.CompilerParams(dimension_semantics=("arbitrary",))

    if mask is None:
        ctx, attn = pl.pallas_call(
            _sdpa_kernel,
            out_shape=out_shape,
            grid=(1,),                              # single invocation: no per-batch grid overhead
            in_specs=[qkv_spec, qkv_spec, qkv_spec],
            out_specs=(qkv_spec, ss_spec),
            compiler_params=cparams,
        )(q3, k3, v3)
    else:
        mask_f = jnp.asarray(mask).astype(jnp.float32)
        mask_f = jnp.broadcast_to(mask_f, lead + (S, S)).reshape(B, S, S)
        ctx, attn = pl.pallas_call(
            _sdpa_masked_kernel,
            out_shape=out_shape,
            grid=(1,),
            in_specs=[qkv_spec, qkv_spec, qkv_spec, ss_spec],
            out_specs=(qkv_spec, ss_spec),
            compiler_params=cparams,
        )(q3, k3, v3, mask_f)

    return ctx.reshape(lead + (S, D)), attn.reshape(lead + (S, S))


def sdpa_ref(Q, K, V, mask=None):
    """Pure-JAX reference matching the PyTorch module."""
    d = Q.shape[-1]
    scores = jnp.einsum("...qd,...kd->...qk", Q, K) / math.sqrt(d)
    if mask is not None:
        scores = jnp.where(jnp.asarray(mask, dtype=bool), -1e9, scores)
    attn = jax.nn.softmax(scores, axis=-1)
    ctx = jnp.einsum("...qk,...kd->...qd", attn, V)
    return ctx, attn


if __name__ == "__main__":
    # Small shapes consistent with the module: batch=2, seq=8, d_model=128
    # (128 keeps the context output lane-dense on TPU).
    B, S, D = 2, 8, 128

    key = jax.random.PRNGKey(0)
    kq, kk, kv = jax.random.split(key, 3)
    Q = jax.random.normal(kq, (B, S, D), dtype=jnp.float32)
    K = jax.random.normal(kk, (B, S, D), dtype=jnp.float32)
    V = jax.random.normal(kv, (B, S, D), dtype=jnp.float32)

    # Unmasked path.
    ctx, attn = scaled_dot_product_attn(Q, K, V)
    ctx, attn = jax.block_until_ready((ctx, attn))
    ctx_r, attn_r = sdpa_ref(Q, K, V)
    assert ctx.shape == (B, S, D), ctx.shape
    assert attn.shape == (B, S, S), attn.shape
    # Tolerance slightly relaxed vs 1e-4 because of the approx EUP reciprocal.
    assert jnp.allclose(attn, attn_r, atol=2e-3, rtol=2e-3), float(jnp.max(jnp.abs(attn - attn_r)))
    assert jnp.allclose(ctx, ctx_r, atol=2e-3, rtol=2e-3), float(jnp.max(jnp.abs(ctx - ctx_r)))

    # Masked path (causal mask, True == masked, matching masked_fill_ semantics).
    mask = jnp.triu(jnp.ones((S, S), dtype=jnp.bool_), k=1)
    ctx_m, attn_m = scaled_dot_product_attn(Q, K, V, mask=mask)
    ctx_m, attn_m = jax.block_until_ready((ctx_m, attn_m))
    ctx_mr, attn_mr = sdpa_ref(Q, K, V, mask=mask)
    assert jnp.allclose(attn_m, attn_mr, atol=2e-3, rtol=2e-3), float(jnp.max(jnp.abs(attn_m - attn_mr)))
    assert jnp.allclose(ctx_m, ctx_mr, atol=2e-3, rtol=2e-3), float(jnp.max(jnp.abs(ctx_m - ctx_mr)))

    print("KERNEL_OK")
</pallas_src>

<mosaic_0001>
module attributes {stable_mosaic.version = 11 : i64} {
  func.func @_sdpa_kernel(%arg0: i32, %arg1: memref<2x8x128xf32, #tpu.memory_space<vmem>>, %arg2: memref<2x8x128xf32, #tpu.memory_space<vmem>>, %arg3: memref<2x8x128xf32, #tpu.memory_space<vmem>>, %arg4: memref<2x8x128xf32, #tpu.memory_space<vmem>>, %arg5: memref<2x8x8xf32, #tpu.memory_space<vmem>>) attributes {dimension_semantics = [#tpu.dimension_semantics<arbitrary>], iteration_bounds = array<i64: 1>, scalar_prefetch = 0 : i64, scratch_operands = 0 : i64, tpu.core_type = #tpu.core_type<tc>, window_params = [{pipeline_mode = #tpu.pipeline_mode<synchronous>, transform_indices = @transform_0, window_bounds = array<i64: 2, 8, 128>}, {pipeline_mode = #tpu.pipeline_mode<synchronous>, transform_indices = @transform_1, window_bounds = array<i64: 2, 8, 128>}, {pipeline_mode = #tpu.pipeline_mode<synchronous>, transform_indices = @transform_2, window_bounds = array<i64: 2, 8, 128>}, {pipeline_mode = #tpu.pipeline_mode<synchronous>, transform_indices = @transform_3, window_bounds = array<i64: 2, 8, 128>}, {pipeline_mode = #tpu.pipeline_mode<synchronous>, transform_indices = @transform_4, window_bounds = array<i64: 2, 8, 8>}]} {
    %c0 = arith.constant 0 : index
    %c0_0 = arith.constant 0 : index
    %c0_1 = arith.constant 0 : index
    %0 = vector.load %arg1[%c0, %c0_0, %c0_1] : memref<2x8x128xf32, #tpu.memory_space<vmem>>, vector<2x8x128xf32>
    %c0_2 = arith.constant 0 : index
    %c0_3 = arith.constant 0 : index
    %c0_4 = arith.constant 0 : index
    %1 = vector.load %arg2[%c0_2, %c0_3, %c0_4] : memref<2x8x128xf32, #tpu.memory_space<vmem>>, vector<2x8x128xf32>
    %c0_5 = arith.constant 0 : index
    %c0_6 = arith.constant 0 : index
    %c0_7 = arith.constant 0 : index
    %2 = vector.load %arg3[%c0_5, %c0_6, %c0_7] : memref<2x8x128xf32, #tpu.memory_space<vmem>>, vector<2x8x128xf32>
    "tpu.trace_start"() <{level = 10 : i32, message = "bqd,bkd->bqk"}> : () -> ()
    %cst = arith.constant dense<0.000000e+00> : vector<2x8x8xf32>
    %3 = tpu.matmul %0, %1, %cst {dimension_numbers = #tpu.dot_dimension_numbers<[2], [2], [1], [1], [0, 0, 0, 1, 1, 1], [0], [0]>} : vector<2x8x128xf32>, vector<2x8x128xf32>, vector<2x8x8xf32> -> vector<2x8x8xf32>
    "tpu.trace_stop"() : () -> ()
    %cst_8 = arith.constant 0.0883883461 : f32
    %4 = vector.broadcast %cst_8 : f32 to vector<2x8x8xf32>
    %5 = arith.mulf %3, %4 : vector<2x8x8xf32>
    %cst_9 = arith.constant dense<0xFF800000> : vector<2x8xf32>
    %6 = vector.multi_reduction <maximumf>, %5, %cst_9 [2] : vector<2x8x8xf32> to vector<2x8xf32>
    %7 = vector.shape_cast %6 : vector<2x8xf32> to vector<2x8x1xf32>
    %8 = vector.broadcast %7 : vector<2x8x1xf32> to vector<2x8x8xf32>
    %9 = arith.subf %5, %8 : vector<2x8x8xf32>
    %10 = math.exp %9 : vector<2x8x8xf32>
    %cst_10 = arith.constant dense<0.000000e+00> : vector<2x8xf32>
    %11 = vector.multi_reduction <add>, %10, %cst_10 [2] : vector<2x8x8xf32> to vector<2x8xf32>
    %12 = vector.shape_cast %11 : vector<2x8xf32> to vector<2x8x1xf32>
    %13 = tpu.reciprocal %12 {approx = true} : vector<2x8x1xf32> -> vector<2x8x1xf32>
    %14 = vector.broadcast %13 : vector<2x8x1xf32> to vector<2x8x8xf32>
    %15 = arith.mulf %10, %14 : vector<2x8x8xf32>
    "tpu.trace_start"() <{level = 10 : i32, message = "bqk,bkd->bqd"}> : () -> ()
    %cst_11 = arith.constant dense<0.000000e+00> : vector<2x8x128xf32>
    %16 = tpu.matmul %15, %2, %cst_11 {dimension_numbers = #tpu.dot_dimension_numbers<[2], [1], [1], [2], [0, 0, 0, 1, 1, 2], [0], [0]>} : vector<2x8x8xf32>, vector<2x8x128xf32>, vector<2x8x128xf32> -> vector<2x8x128xf32>
    "tpu.trace_stop"() : () -> ()
    %c0_12 = arith.constant 0 : index
    %c0_13 = arith.constant 0 : index
    %c0_14 = arith.constant 0 : index
    %17 = vector.load %arg4[%c0_12, %c0_13, %c0_14] : memref<2x8x128xf32, #tpu.memory_space<vmem>>, vector<2x8x128xf32>
    tpu.vector_store %arg4[%c0_12, %c0_13, %c0_14], %16 {strides = array<i32>} : memref<2x8x128xf32, #tpu.memory_space<vmem>>, vector<2x8x128xf32>,
    %c0_15 = arith.constant 0 : index
    %c0_16 = arith.constant 0 : index
    %c0_17 = arith.constant 0 : index
    %18 = vector.load %arg5[%c0_15, %c0_16, %c0_17] : memref<2x8x8xf32, #tpu.memory_space<vmem>>, vector<2x8x8xf32>
    tpu.vector_store %arg5[%c0_15, %c0_16, %c0_17], %15 {strides = array<i32>} : memref<2x8x8xf32, #tpu.memory_space<vmem>>, vector<2x8x8xf32>,
    return
  }
  func.func @transform_0(%arg0: i32) -> (i32, i32, i32) {
    %c0_i32 = arith.constant 0 : i32
    %c0_i32_0 = arith.constant 0 : i32
    %c0_i32_1 = arith.constant 0 : i32
    %c0_i32_2 = arith.constant 0 : i32
    return %c0_i32, %c0_i32_0, %c0_i32_1 : i32, i32, i32
  }
  func.func @transform_1(%arg0: i32) -> (i32, i32, i32) {
    %c0_i32 = arith.constant 0 : i32
    %c0_i32_0 = arith.constant 0 : i32
    %c0_i32_1 = arith.constant 0 : i32
    %c0_i32_2 = arith.constant 0 : i32
    return %c0_i32, %c0_i32_0, %c0_i32_1 : i32, i32, i32
  }
  func.func @transform_2(%arg0: i32) -> (i32, i32, i32) {
    %c0_i32 = arith.constant 0 : i32
    %c0_i32_0 = arith.constant 0 : i32
    %c0_i32_1 = arith.constant 0 : i32
    %c0_i32_2 = arith.constant 0 : i32
    return %c0_i32, %c0_i32_0, %c0_i32_1 : i32, i32, i32
  }
  func.func @transform_3(%arg0: i32) -> (i32, i32, i32) {
    %c0_i32 = arith.constant 0 : i32
    %c0_i32_0 = arith.constant 0 : i32
    %c0_i32_1 = arith.constant 0 : i32
    %c0_i32_2 = arith.constant 0 : i32
    return %c0_i32, %c0_i32_0, %c0_i32_1 : i32, i32, i32
  }
  func.func @transform_4(%arg0: i32) -> (i32, i32, i32) {
    %c0_i32 = arith.constant 0 : i32
    %c0_i32_0 = arith.constant 0 : i32
    %c0_i32_1 = arith.constant 0 : i32
    %c0_i32_2 = arith.constant 0 : i32
    return %c0_i32, %c0_i32_0, %c0_i32_1 : i32, i32, i32
  }
}

</mosaic_0001>

<llo_original>
// kernel: tpu_custom_call.1
$region0: #{tpu_custom_call.1}
  #allocation0 [shape = 'u32[]', space=smem, size = 0x4, offset = 0x4, fixed_abs, tag = 'smem constant byte address 0x4 - core index']
  #allocation1 [shape = 'u32[144,128]{1,0:T(1,128)}', space=vmem, size = 0x12000, scoped, tag = 'internal scratch']
  %s0 = inlined_call_operand.hbm [shape: f32[2,8,128], index: 0, kind: input, shape index: {}]
  %s1 = inlined_call_operand.hbm [shape: f32[2,8,128], index: 1, kind: input, shape index: {}]
  %s2 = inlined_call_operand.hbm [shape: f32[2,8,128], index: 2, kind: input, shape index: {}]
  %s3 = inlined_call_operand.hbm [shape: f32[2,8,128], index: 3, kind: output, shape index: {0}]
  %s4 = inlined_call_operand.hbm [shape: f32[2,8,8], index: 4, kind: output, shape index: {1}]
  %5 = xla_tuple %s3, %s4
  %s6 = sld [smem:[#allocation0]]
  $region42: #{tpu_custom_call.1} parent=0
    _
  %s8 = ssub.s32 1, %s6
  %s9 = scalar_select 0, %s8, %s6
  $region1: #{tpu_custom_call.1} parent=0
    #allocation2 [shape = 'u8[8192]{0}', space=vmem, size = 0x2000, scoped, tag = 'input window, operand 0, single buffered']
    #allocation3 [shape = 's32[1]{0}', space=sflag, size = 0x4, scoped, tag = 'scoped memory for tpu_custom_call.1']
    #allocation4 [shape = 's32[1]{0}', space=sflag, size = 0x4, scoped, tag = 'scoped memory for tpu_custom_call.1']
    #allocation5 [shape = 'u8[8192]{0}', space=vmem, size = 0x2000, scoped, tag = 'input window, operand 1, single buffered']
    #allocation6 [shape = 's32[1]{0}', space=sflag, size = 0x4, scoped, tag = 'scoped memory for tpu_custom_call.1']
    #allocation7 [shape = 'u8[8192]{0}', space=vmem, size = 0x2000, scoped, tag = 'input window, operand 2, single buffered']
    #allocation8 [shape = 'u8[8192]{0}', space=vmem, size = 0x2000, scoped, tag = 'output window, operand 0, single buffered']
    #allocation9 [shape = 'u8[8192]{0}', space=vmem, size = 0x2000, scoped, tag = 'output window, operand 1, single buffered']
    #allocation10 [shape = 's32[1]{0}', space=sflag, size = 0x4, scoped, tag = 'scoped memory for tpu_custom_call.1']
    %10 = vsyncpa [#allocation3], 0
    %11 = vsyncpa [#allocation6], 0
    %12 = vsyncpa [#allocation4], 0
    %13 = vsyncpa [#allocation10], 0
    // Predicated region
    $region2: #{tpu_custom_call.1} parent=1 // pred_check
      _
    $region3: #{tpu_custom_call.1} parent=1 // pred_check_branch
      %15 = sbr.rel (0) target = $region5
    $region4: #{tpu_custom_call.1} parent=1 // pred_region
      %s17 = ssub.s32 256, 256
      %18 = vsyncadd [#allocation3], %s17
      %s19 = sshll.u32 [#allocation2], 4
      %s20 = int_to_ptr.vmem [resolvable:$true] %s19
      %25 = dma.hbm_to_vmem [thread:$0]  %s0, 256, %s20, [#allocation3], 128, 128, 8
    $region5: #{tpu_custom_call.1} parent=1 // pred_fallthru
      _
    // Predicated region
    $region6: #{tpu_custom_call.1} parent=1 // pred_check
      _
    $region7: #{tpu_custom_call.1} parent=1 // pred_check_branch
      %27 = sbr.rel (0) target = $region9
    $region8: #{tpu_custom_call.1} parent=1 // pred_region
      %s29 = ssub.s32 256, 256
      %30 = vsyncadd [#allocation6], %s29
      %s31 = sshll.u32 [#allocation5], 4
      %s32 = int_to_ptr.vmem [resolvable:$true] %s31
      %37 = dma.hbm_to_vmem [thread:$0]  %s1, 256, %s32, [#allocation6], 128, 128, 8
    $region9: #{tpu_custom_call.1} parent=1 // pred_fallthru
      _
    // Predicated region
    $region10: #{tpu_custom_call.1} parent=1 // pred_check
      _
    $region11: #{tpu_custom_call.1} parent=1 // pred_check_branch
      %39 = sbr.rel (0) target = $region13
    $region12: #{tpu_custom_call.1} parent=1 // pred_region
      %s41 = ssub.s32 256, 256
      %42 = vsyncadd [#allocation6], %s41
      %s43 = sshll.u32 [#allocation7], 4
      %s44 = int_to_ptr.vmem [resolvable:$true] %s43
      %49 = dma.hbm_to_vmem [thread:$0]  %s2, 256, %s44, [#allocation6], 128, 128, 8
    $region13: #{tpu_custom_call.1} parent=1 // pred_fallthru
      _
    // Predicated region
    $region14: #{tpu_custom_call.1} parent=1 // pred_check
      _
    $region15: #{tpu_custom_call.1} parent=1 // pred_check_branch
      %51 = sbr.rel (0) target = $region17
    $region16: #{tpu_custom_call.1} parent=1 // pred_region
      %52 = dma.done [#allocation3], 256
    $region17: #{tpu_custom_call.1} parent=1 // pred_fallthru
      _
    // Predicated region
    $region18: #{tpu_custom_call.1} parent=1 // pred_check
      _
    $region19: #{tpu_custom_call.1} parent=1 // pred_check_branch
      %54 = sbr.rel (0) target = $region21
    $region20: #{tpu_custom_call.1} parent=1 // pred_region
      %55 = dma.done [#allocation6], 256
    $region21: #{tpu_custom_call.1} parent=1 // pred_fallthru
      _
    // Predicated region
    $region22: #{tpu_custom_call.1} parent=1 // pred_check
      _
    $region23: #{tpu_custom_call.1} parent=1 // pred_check_branch
      %57 = sbr.rel (0) target = $region25
    $region24: #{tpu_custom_call.1} parent=1 // pred_region
      %58 = dma.done [#allocation6], 256
    $region25: #{tpu_custom_call.1} parent=1 // pred_fallthru
      _
    %v59 = vld [vmem:[#allocation2] sm:$0xff]
    %v60 = vld [vmem:[#allocation2 + $0x8] sm:$0xff]
    %v61 = vld [vmem:[#allocation5] sm:$0xff]
    %v62 = vld [vmem:[#allocation5 + $0x8] sm:$0xff]
    %v63 = vld [vmem:[#allocation7] sm:$0xff]
    %v64 = vld [vmem:[#allocation7 + $0x8] sm:$0xff]
    %65 = vmatprep.subr.mxu0 0.0
    %66 = vmatpush1.xpose.msra.mxu0 0.0
    %67 = vmatprep.subr.mxu0 0.0
    %68 = vmatpush1.xpose.msra.mxu0 0.0
    %69 = vmatprep.subr.mxu0 0.0
    %70 = vmatpush1.xpose.msra.mxu0 0.0
    %71 = vmatprep.subr.mxu0 0.0
    %72 = vmatpush1.xpose.msra.mxu0 0.0
    %73 = vmatprep.subr.mxu0 0.0
    %74 = vmatpush1.xpose.msra.mxu0 0.0
    %75 = vmatprep.subr.mxu0 0.0
    %76 = vmatpush1.xpose.msra.mxu0 0.0
    %77 = vmatprep.subr.mxu0 0.0
    %78 = vmatpush1.xpose.msra.mxu0 0.0
    %79 = vmatprep.subr.mxu0 0.0
    %80 = vmatpush1.xpose.msra.mxu0 0.0
    %81 = vmatprep.subr.mxu0 0.0
    %82 = vmatpush1.xpose.msra.mxu0 0.0
    %83 = vmatprep.subr.mxu0 0.0
    %84 = vmatpush1.xpose.msra.mxu0 0.0
    %85 = vmatprep.subr.mxu0 0.0
    %86 = vmatpush1.xpose.msra.mxu0 0.0
    %87 = vmatprep.subr.mxu0 0.0
    %88 = vmatpush1.xpose.msra.mxu0 0.0
    %89 = vmatprep.subr.mxu0 0.0
    %90 = vmatpush1.xpose.msra.mxu0 0.0
    %91 = vmatprep.subr.mxu0 0.0
    %92 = vmatpush1.xpose.msra.mxu0 0.0
    %93 = vmatprep.subr.mxu0 0.0
    %94 = vmatpush1.xpose.msra.mxu0 0.0
    %95 = vmatprep.subr.mxu0 0.0
    %96 = vmatpush1.xpose.msra.mxu0 %v61
    %97 = vmatprep.subr.mxu0 0.0
    %98 = vmatpush2.xpose.msra.mxu0 0.0
    %99 = vmatprep.subr.mxu0 0.0
    %100 = vmatpush2.xpose.msra.mxu0 0.0
    %101 = vmatprep.subr.mxu0 0.0
    %102 = vmatpush2.xpose.msra.mxu0 0.0
    %103 = vmatprep.subr.mxu0 0.0
    %104 = vmatpush2.xpose.msra.mxu0 0.0
    %105 = vmatprep.subr.mxu0 0.0
    %106 = vmatpush2.xpose.msra.mxu0 0.0
    %107 = vmatprep.subr.mxu0 0.0
    %108 = vmatpush2.xpose.msra.mxu0 0.0
    %109 = vmatprep.subr.mxu0 0.0
    %110 = vmatpush2.xpose.msra.mxu0 0.0
    %111 = vmatprep.subr.mxu0 0.0
    %112 = vmatpush2.xpose.msra.mxu0 0.0
    %113 = vmatprep.subr.mxu0 0.0
    %114 = vmatpush2.xpose.msra.mxu0 0.0
    %115 = vmatprep.subr.mxu0 0.0
    %116 = vmatpush2.xpose.msra.mxu0 0.0
    %117 = vmatprep.subr.mxu0 0.0
    %118 = vmatpush2.xpose.msra.mxu0 0.0
    %119 = vmatprep.subr.mxu0 0.0
    %120 = vmatpush2.xpose.msra.mxu0 0.0
    %121 = vmatprep.subr.mxu0 0.0
    %122 = vmatpush2.xpose.msra.mxu0 0.0
    %123 = vmatprep.subr.mxu0 0.0
    %124 = vmatpush2.xpose.msra.mxu0 0.0
    %125 = vmatprep.subr.mxu0 0.0
    %126 = vmatpush2.xpose.msra.mxu0 0.0
    %127 = vmatprep.subr.mxu0 0.0
    %128 = vmatpush2.xpose.msra.mxu0 0.0
    %129 = vmatprep.mubr.f32.mxu0 0.0
    %130 = vmatmul.mubr.f32.gmra.mxu0 %v59
    %v131 = vpop.f32.mrf.mxu0
    %v132 = vadd.f32 0.0, %v131
    %v133 = vpop.f32.mrf.mxu0
    %134 = vdwg.mxu0
    %135 = vmatprep.subr.mxu0 0.0
    %136 = vmatpush1.xpose.msra.mxu0 0.0
    %137 = vmatprep.subr.mxu0 0.0
    %138 = vmatpush1.xpose.msra.mxu0 0.0
    %139 = vmatprep.subr.mxu0 0.0
    %140 = vmatpush1.xpose.msra.mxu0 0.0
    %141 = vmatprep.subr.mxu0 0.0
    %142 = vmatpush1.xpose.msra.mxu0 0.0
    %143 = vmatprep.subr.mxu0 0.0
    %144 = vmatpush1.xpose.msra.mxu0 0.0
    %145 = vmatprep.subr.mxu0 0.0
    %146 = vmatpush1.xpose.msra.mxu0 0.0
    %147 = vmatprep.subr.mxu0 0.0
    %148 = vmatpush1.xpose.msra.mxu0 0.0
    %149 = vmatprep.subr.mxu0 0.0
    %150 = vmatpush1.xpose.msra.mxu0 0.0
    %151 = vmatprep.subr.mxu0 0.0
    %152 = vmatpush1.xpose.msra.mxu0 0.0
    %153 = vmatprep.subr.mxu0 0.0
    %154 = vmatpush1.xpose.msra.mxu0 0.0
    %155 = vmatprep.subr.mxu0 0.0
    %156 = vmatpush1.xpose.msra.mxu0 0.0
    %157 = vmatprep.subr.mxu0 0.0
    %158 = vmatpush1.xpose.msra.mxu0 0.0
    %159 = vmatprep.subr.mxu0 0.0
    %160 = vmatpush1.xpose.msra.mxu0 0.0
    %161 = vmatprep.subr.mxu0 0.0
    %162 = vmatpush1.xpose.msra.mxu0 0.0
    %163 = vmatprep.subr.mxu0 0.0
    %164 = vmatpush1.xpose.msra.mxu0 0.0
    %165 = vmatprep.subr.mxu0 0.0
    %166 = vmatpush1.xpose.msra.mxu0 %v62
    %167 = vmatprep.subr.mxu0 0.0
    %168 = vmatpush2.xpose.msra.mxu0 0.0
    %169 = vmatprep.subr.mxu0 0.0
    %170 = vmatpush2.xpose.msra.mxu0 0.0
    %171 = vmatprep.subr.mxu0 0.0
    %172 = vmatpush2.xpose.msra.mxu0 0.0
    %173 = vmatprep.subr.mxu0 0.0
    %174 = vmatpush2.xpose.msra.mxu0 0.0
    %175 = vmatprep.subr.mxu0 0.0
    %176 = vmatpush2.xpose.msra.mxu0 0.0
    %177 = vmatprep.subr.mxu0 0.0
    %178 = vmatpush2.xpose.msra.mxu0 0.0
    %179 = vmatprep.subr.mxu0 0.0
    %180 = vmatpush2.xpose.msra.mxu0 0.0
    %181 = vmatprep.subr.mxu0 0.0
    %182 = vmatpush2.xpose.msra.mxu0 0.0
    %183 = vmatprep.subr.mxu0 0.0
    %184 = vmatpush2.xpose.msra.mxu0 0.0
    %185 = vmatprep.subr.mxu0 0.0
    %186 = vmatpush2.xpose.msra.mxu0 0.0
    %187 = vmatprep.subr.mxu0 0.0
    %188 = vmatpush2.xpose.msra.mxu0 0.0
    %189 = vmatprep.subr.mxu0 0.0
    %190 = vmatpush2.xpose.msra.mxu0 0.0
    %191 = vmatprep.subr.mxu0 0.0
    %192 = vmatpush2.xpose.msra.mxu0 0.0
    %193 = vmatprep.subr.mxu0 0.0
    %194 = vmatpush2.xpose.msra.mxu0 0.0
    %195 = vmatprep.subr.mxu0 0.0
    %196 = vmatpush2.xpose.msra.mxu0 0.0
    %197 = vmatprep.subr.mxu0 0.0
    %198 = vmatpush2.xpose.msra.mxu0 0.0
    %199 = vmatprep.mubr.f32.mxu0 0.0
    %200 = vmatmul.mubr.f32.gmra.mxu0 %v60
    %v201 = vpop.f32.mrf.mxu0
    %v202 = vadd.f32 0.0, %v201
    %v203 = vpop.f32.mrf.mxu0
    %204 = vdwg.mxu0
    %v205 = vmul.f32 %v132, 0.088388346
    %v206 = vmul.f32 %v202, 0.088388346
    %vm207 = vcmask 64512
    %v208 = vsel %vm207, %v205, -inf
    %209 = vmax.xlane.f32.xlu0 %v208
    %v210 = vpop.xlane.xlu0 %209
    %v211 = vsel %vm207, %v206, -inf
    %212 = vmax.xlane.f32.xlu0 %v211
    %v213 = vpop.xlane.xlu0 %212
    %v214 = vsub.f32 %v205, %v210
    %v215 = vsub.f32 %v206, %v213
    %v216 = vmul.f32 %v214, 1.442695
    %v217 = vpow.pop %v216
    %v218 = vmul.f32 %v215, 1.442695
    %v219 = vpow.pop %v218
    %v220 = vsel %vm207, %v217, 0.0
    %221 = vadd.xlane.f32.xlu0 %v220
    %v222 = vpop.xlane.xlu0 %221
    %v223 = vsel %vm207, %v219, 0.0
    %224 = vadd.xlane.f32.xlu0 %v223
    %v225 = vpop.xlane.xlu0 %224
    %v226 = vrcp.pop %v222
    %v227 = vrcp.pop %v225
    %v228 = vmul.f32 %v217, %v226
    %v229 = vmul.f32 %v219, %v227
    %v231 = vsel %vm207, %v228, 0
    %233 = vmatprep.subr.mxu0 0.0
    %234 = vmatpush1.msra.mxu0 0.0
    %235 = vmatprep.subr.mxu0 0.0
    %236 = vmatpush1.msra.mxu0 0.0
    %237 = vmatprep.subr.mxu0 0.0
    %238 = vmatpush1.msra.mxu0 0.0
    %239 = vmatprep.subr.mxu0 0.0
    %240 = vmatpush1.msra.mxu0 0.0
    %241 = vmatprep.subr.mxu0 0.0
    %242 = vmatpush1.msra.mxu0 0.0
    %243 = vmatprep.subr.mxu0 0.0
    %244 = vmatpush1.msra.mxu0 0.0
    %245 = vmatprep.subr.mxu0 0.0
    %246 = vmatpush1.msra.mxu0 0.0
    %247 = vmatprep.subr.mxu0 0.0
    %248 = vmatpush1.msra.mxu0 0.0
    %249 = vmatprep.subr.mxu0 0.0
    %250 = vmatpush1.msra.mxu0 0.0
    %251 = vmatprep.subr.mxu0 0.0
    %252 = vmatpush1.msra.mxu0 0.0
    %253 = vmatprep.subr.mxu0 0.0
    %254 = vmatpush1.msra.mxu0 0.0
    %255 = vmatprep.subr.mxu0 0.0
    %256 = vmatpush1.msra.mxu0 0.0
    %257 = vmatprep.subr.mxu0 0.0
    %258 = vmatpush1.msra.mxu0 0.0
    %259 = vmatprep.subr.mxu0 0.0
    %260 = vmatpush1.msra.mxu0 0.0
    %261 = vmatprep.subr.mxu0 0.0
    %262 = vmatpush1.msra.mxu0 0.0
    %263 = vmatprep.subr.mxu0 0.0
    %264 = vmatpush1.msra.mxu0 %v63
    %265 = vmatprep.subr.mxu0 0.0
    %266 = vmatpush2.msra.mxu0 0.0
    %267 = vmatprep.subr.mxu0 0.0
    %268 = vmatpush2.msra.mxu0 0.0
    %269 = vmatprep.subr.mxu0 0.0
    %270 = vmatpush2.msra.mxu0 0.0
    %271 = vmatprep.subr.mxu0 0.0
    %272 = vmatpush2.msra.mxu0 0.0
    %273 = vmatprep.subr.mxu0 0.0
    %274 = vmatpush2.msra.mxu0 0.0
    %275 = vmatprep.subr.mxu0 0.0
    %276 = vmatpush2.msra.mxu0 0.0
    %277 = vmatprep.subr.mxu0 0.0
    %278 = vmatpush2.msra.mxu0 0.0
    %279 = vmatprep.subr.mxu0 0.0
    %280 = vmatpush2.msra.mxu0 0.0
    %281 = vmatprep.subr.mxu0 0.0
    %282 = vmatpush2.msra.mxu0 0.0
    %283 = vmatprep.subr.mxu0 0.0
    %284 = vmatpush2.msra.mxu0 0.0
    %285 = vmatprep.subr.mxu0 0.0
    %286 = vmatpush2.msra.mxu0 0.0
    %287 = vmatprep.subr.mxu0 0.0
    %288 = vmatpush2.msra.mxu0 0.0
    %289 = vmatprep.subr.mxu0 0.0
    %290 = vmatpush2.msra.mxu0 0.0
    %291 = vmatprep.subr.mxu0 0.0
    %292 = vmatpush2.msra.mxu0 0.0
    %293 = vmatprep.subr.mxu0 0.0
    %294 = vmatpush2.msra.mxu0 0.0
    %295 = vmatprep.subr.mxu0 0.0
    %296 = vmatpush2.msra.mxu0 0.0
    %297 = vmatprep.mubr.f32.mxu0 0.0
    %298 = vmatmul.mubr.f32.gmra.mxu0 %v231
    %v299 = vpop.f32.mrf.mxu0
    %v300 = vadd.f32 0.0, %v299
    %v301 = vpop.f32.mrf.mxu0
    %302 = vdwg.mxu0
    %v304 = vsel %vm207, %v229, 0
    %306 = vmatprep.subr.mxu0 0.0
    %307 = vmatpush1.msra.mxu0 0.0
    %308 = vmatprep.subr.mxu0 0.0
    %309 = vmatpush1.msra.mxu0 0.0
    %310 = vmatprep.subr.mxu0 0.0
    %311 = vmatpush1.msra.mxu0 0.0
    %312 = vmatprep.subr.mxu0 0.0
    %313 = vmatpush1.msra.mxu0 0.0
    %314 = vmatprep.subr.mxu0 0.0
    %315 = vmatpush1.msra.mxu0 0.0
    %316 = vmatprep.subr.mxu0 0.0
    %317 = vmatpush1.msra.mxu0 0.0
    %318 = vmatprep.subr.mxu0 0.0
    %319 = vmatpush1.msra.mxu0 0.0
    %320 = vmatprep.subr.mxu0 0.0
    %321 = vmatpush1.msra.mxu0 0.0
    %322 = vmatprep.subr.mxu0 0.0
    %323 = vmatpush1.msra.mxu0 0.0
    %324 = vmatprep.subr.mxu0 0.0
    %325 = vmatpush1.msra.mxu0 0.0
    %326 = vmatprep.subr.mxu0 0.0
    %327 = vmatpush1.msra.mxu0 0.0
    %328 = vmatprep.subr.mxu0 0.0
    %329 = vmatpush1.msra.mxu0 0.0
    %330 = vmatprep.subr.mxu0 0.0
    %331 = vmatpush1.msra.mxu0 0.0
    %332 = vmatprep.subr.mxu0 0.0
    %333 = vmatpush1.msra.mxu0 0.0
    %334 = vmatprep.subr.mxu0 0.0
    %335 = vmatpush1.msra.mxu0 0.0
    %336 = vmatprep.subr.mxu0 0.0
    %337 = vmatpush1.msra.mxu0 %v64
    %338 = vmatprep.subr.mxu0 0.0
    %339 = vmatpush2.msra.mxu0 0.0
    %340 = vmatprep.subr.mxu0 0.0
    %341 = vmatpush2.msra.mxu0 0.0
    %342 = vmatprep.subr.mxu0 0.0
    %343 = vmatpush2.msra.mxu0 0.0
    %344 = vmatprep.subr.mxu0 0.0
    %345 = vmatpush2.msra.mxu0 0.0
    %346 = vmatprep.subr.mxu0 0.0
    %347 = vmatpush2.msra.mxu0 0.0
    %348 = vmatprep.subr.mxu0 0.0
    %349 = vmatpush2.msra.mxu0 0.0
    %350 = vmatprep.subr.mxu0 0.0
    %351 = vmatpush2.msra.mxu0 0.0
    %352 = vmatprep.subr.mxu0 0.0
    %353 = vmatpush2.msra.mxu0 0.0
    %354 = vmatprep.subr.mxu0 0.0
    %355 = vmatpush2.msra.mxu0 0.0
    %356 = vmatprep.subr.mxu0 0.0
    %357 = vmatpush2.msra.mxu0 0.0
    %358 = vmatprep.subr.mxu0 0.0
    %359 = vmatpush2.msra.mxu0 0.0
    %360 = vmatprep.subr.mxu0 0.0
    %361 = vmatpush2.msra.mxu0 0.0
    %362 = vmatprep.subr.mxu0 0.0
    %363 = vmatpush2.msra.mxu0 0.0
    %364 = vmatprep.subr.mxu0 0.0
    %365 = vmatpush2.msra.mxu0 0.0
    %366 = vmatprep.subr.mxu0 0.0
    %367 = vmatpush2.msra.mxu0 0.0
    %368 = vmatprep.subr.mxu0 0.0
    %369 = vmatpush2.msra.mxu0 0.0
    %370 = vmatprep.mubr.f32.mxu0 0.0
    %371 = vmatmul.mubr.f32.gmra.mxu0 %v304
    %v372 = vpop.f32.mrf.mxu0
    %v373 = vadd.f32 0.0, %v372
    %v374 = vpop.f32.mrf.mxu0
    %375 = vdwg.mxu0
    %376 = vst [vmem:[#allocation8] sm:$0xff] %v300
    %377 = vst [vmem:[#allocation8 + $0x8] sm:$0xff] %v373
    %378 = vst.msk [vmem:[#allocation9] sm:$0xff] %vm207, %v228
    %379 = vst.msk [vmem:[#allocation9 + $0x8] sm:$0xff] %vm207, %v229
    // Predicated region
    $region26: #{tpu_custom_call.1} parent=1 // pred_check
      _
    $region27: #{tpu_custom_call.1} parent=1 // pred_check_branch
      %381 = sbr.rel (0) target = $region29
    $region28: #{tpu_custom_call.1} parent=1 // pred_region
      %s383 = ssub.s32 256, 256
      %384 = vsyncadd [#allocation4], %s383
      %s385 = sshll.u32 [#allocation8], 4
      %s386 = int_to_ptr.vmem [resolvable:$true] %s385
      %391 = dma.vmem_to_hbm [thread:$0]  %s386, 256, %s3, [#allocation4], 128, 128, 8
    $region29: #{tpu_custom_call.1} parent=1 // pred_fallthru
      _
    // Predicated region
    $region30: #{tpu_custom_call.1} parent=1 // pred_check
      _
    $region31: #{tpu_custom_call.1} parent=1 // pred_check_branch
      %393 = sbr.rel (0) target = $region33
    $region32: #{tpu_custom_call.1} parent=1 // pred_region
      %s395 = ssub.s32 256, 256
      %396 = vsyncadd [#allocation10], %s395
      %s397 = sshll.u32 [#allocation9], 4
      %s398 = int_to_ptr.vmem [resolvable:$true] %s397
      %403 = dma.vmem_to_hbm [thread:$0]  %s398, 256, %s4, [#allocation10], 128, 128, 8
    $region33: #{tpu_custom_call.1} parent=1 // pred_fallthru
      _
    // Predicated region
    $region34: #{tpu_custom_call.1} parent=1 // pred_check
      _
    $region35: #{tpu_custom_call.1} parent=1 // pred_check_branch
      %405 = sbr.rel (0) target = $region37
    $region36: #{tpu_custom_call.1} parent=1 // pred_region
      %406 = dma.done [#allocation4], 256
    $region37: #{tpu_custom_call.1} parent=1 // pred_fallthru
      _
    // Predicated region
    $region38: #{tpu_custom_call.1} parent=1 // pred_check
      _
    $region39: #{tpu_custom_call.1} parent=1 // pred_check_branch
      %408 = sbr.rel (0) target = $region41
    $region40: #{tpu_custom_call.1} parent=1 // pred_region
      %409 = dma.done [#allocation10], 256
    $region41: #{tpu_custom_call.1} parent=1 // pred_fallthru
      _
    %410 = vsyncpa [#allocation3], 1
    %411 = vsyncpa [#allocation6], 1
    %412 = vsyncpa [#allocation4], 1
    %413 = vsyncpa [#allocation10], 1

</llo_original>
